<compile_context>
chip_gen: v6e
topology: v6e:2x2x1
jax: 0.10.0
libtpu: 0.0.40
codegen_flags: <defaults>
</compile_context>

<pallas_src>
import jax
import jax.numpy as jnp
from jax.experimental import pallas as pl
from jax.experimental.pallas import tpu as pltpu
import numpy as np


def fofo_kernel(x_ref, w1t_ref, w2t_ref, out_ref):
    # x_ref:   (Nb, C, S)   activations, spatial flattened into the lane dim
    # w1t_ref: (C, Cr)      fc1 weight transposed   (Linear(C -> Cr, bias=False))
    # w2t_ref: (Cr, C)      fc2 weight transposed   (Linear(Cr -> C, bias=False))
    # out_ref: (Nb, C, S)
    x = x_ref[...].astype(jnp.float32)                       # (Nb, C, S)

    # Squeeze: global average pool over spatial, per image / per channel.
    y = jnp.mean(x, axis=-1, keepdims=True)                  # (Nb, C, 1)

    # Excitation MLP on the VPU (dims are tiny; skip the MXU entirely).
    w1t = w1t_ref[...]                                       # (C, Cr)
    w2t = w2t_ref[...]                                       # (Cr, C)
    h = jnp.sum(y * w1t[None, :, :], axis=1)                 # (Nb, Cr) == y @ W1^T
    h = jnp.maximum(h, 0.0)                                  # ReLU
    z = jnp.sum(h[:, :, None] * w2t[None, :, :], axis=1)     # (Nb, C)  == h @ W2^T
    s = 1.0 / (1.0 + jnp.exp(-z))                            # sigmoid

    # Scale: broadcast the per-channel gate across the spatial lanes.
    out_ref[...] = (x * s[:, :, None]).astype(out_ref.dtype)


def _pick_batch_block(n, per_img_bytes, target_bytes=2 << 20):
    """Pack enough images per grid step to reach ~target_bytes of activations."""
    nb = max(1, min(n, target_bytes // max(per_img_bytes, 1)))
    while n % nb:           # keep the grid exact (no partial batch blocks)
        nb -= 1
    return nb


def fofo_forward(x, w1, w2):
    """x: (N, C, H, W); w1: (C//r, C); w2: (C, C//r). Returns (N, C, H, W)."""
    N, C, H, W = x.shape
    Cr = w1.shape[0]
    S = H * W

    xf = x.reshape(N, C, S)          # contiguous view: lane dim = S (lane-dense)
    w1t = jnp.transpose(w1)          # (C, Cr)
    w2t = jnp.transpose(w2)          # (Cr, C)

    nb = _pick_batch_block(N, C * S * x.dtype.itemsize)
    grid = (N // nb,)

    out = pl.pallas_call(
        fofo_kernel,
        out_shape=jax.ShapeDtypeStruct((N, C, S), x.dtype),
        grid=grid,
        in_specs=[
            pl.BlockSpec((nb, C, S), lambda n: (n, 0, 0)),
            pl.BlockSpec((C, Cr), lambda n: (0, 0)),
            pl.BlockSpec((Cr, C), lambda n: (0, 0)),
        ],
        out_specs=pl.BlockSpec((nb, C, S), lambda n: (n, 0, 0)),
        compiler_params=pltpu.CompilerParams(
            dimension_semantics=("parallel",)),
    )(xf, w1t, w2t)

    return out.reshape(N, C, H, W)


def fofo_reference(x, w1, w2):
    """Pure-JAX reference mirroring the PyTorch FoFo module."""
    y = x.mean(axis=(2, 3))                          # (N, C)
    h = jnp.maximum(y @ w1.T, 0.0)                   # (N, C//r)
    s = jax.nn.sigmoid(h @ w2.T)                     # (N, C)
    return x * s[:, :, None, None]


if __name__ == "__main__":
    # FoFo(channel=32, reduction=16) -> hidden = 2.
    N, C, H, W = 2, 32, 16, 16
    reduction = 16
    Cr = C // reduction

    key = jax.random.PRNGKey(0)
    kx, k1, k2 = jax.random.split(key, 3)

    x = jax.random.normal(kx, (N, C, H, W), dtype=jnp.float32)
    # nn.Linear(C, C//r, bias=False).weight has shape (C//r, C)
    w1 = jax.random.normal(k1, (Cr, C), dtype=jnp.float32) * (1.0 / np.sqrt(C))
    # nn.Linear(C//r, C, bias=False).weight has shape (C, C//r)
    w2 = jax.random.normal(k2, (C, Cr), dtype=jnp.float32) * (1.0 / np.sqrt(Cr))

    out = jax.block_until_ready(fofo_forward(x, w1, w2))
    ref = jax.block_until_ready(fofo_reference(x, w1, w2))

    assert out.shape == (N, C, H, W), out.shape
    np.testing.assert_allclose(np.asarray(out), np.asarray(ref),
                               rtol=1e-4, atol=1e-4)

    print("KERNEL_OK")
</pallas_src>

<mosaic_0001>
module attributes {stable_mosaic.version = 11 : i64} {
  func.func @fofo_kernel(%arg0: i32, %arg1: memref<2x32x256xf32, #tpu.memory_space<vmem>>, %arg2: memref<32x2xf32, #tpu.memory_space<vmem>>, %arg3: memref<2x32xf32, #tpu.memory_space<vmem>>, %arg4: memref<2x32x256xf32, #tpu.memory_space<vmem>>) attributes {dimension_semantics = [#tpu.dimension_semantics<parallel>], iteration_bounds = array<i64: 1>, scalar_prefetch = 0 : i64, scratch_operands = 0 : i64, tpu.core_type = #tpu.core_type<tc>, window_params = [{transform_indices = @transform_0, window_bounds = array<i64: 2, 32, 256>}, {pipeline_mode = #tpu.pipeline_mode<synchronous>, transform_indices = @transform_1, window_bounds = array<i64: 32, 2>}, {pipeline_mode = #tpu.pipeline_mode<synchronous>, transform_indices = @transform_2, window_bounds = array<i64: 2, 32>}, {transform_indices = @transform_3, window_bounds = array<i64: 2, 32, 256>}]} {
    %c0 = arith.constant 0 : index
    %c0_0 = arith.constant 0 : index
    %c0_1 = arith.constant 0 : index
    %0 = vector.load %arg1[%c0, %c0_0, %c0_1] : memref<2x32x256xf32, #tpu.memory_space<vmem>>, vector<2x32x256xf32>
    %cst = arith.constant dense<0.000000e+00> : vector<2x32xf32>
    %1 = vector.multi_reduction <add>, %0, %cst [2] : vector<2x32x256xf32> to vector<2x32xf32>
    %2 = vector.shape_cast %1 : vector<2x32xf32> to vector<2x32x1xf32>
    %cst_2 = arith.constant 2.560000e+02 : f32
    %3 = vector.broadcast %cst_2 : f32 to vector<2x32x1xf32>
    %4 = arith.divf %2, %3 : vector<2x32x1xf32>
    %c0_3 = arith.constant 0 : index
    %c0_4 = arith.constant 0 : index
    %5 = vector.load %arg2[%c0_3, %c0_4] : memref<32x2xf32, #tpu.memory_space<vmem>>, vector<32x2xf32>
    %c0_5 = arith.constant 0 : index
    %c0_6 = arith.constant 0 : index
    %6 = vector.load %arg3[%c0_5, %c0_6] : memref<2x32xf32, #tpu.memory_space<vmem>>, vector<2x32xf32>
    %7 = vector.shape_cast %5 : vector<32x2xf32> to vector<1x32x2xf32>
    %8 = vector.broadcast %4 : vector<2x32x1xf32> to vector<2x32x2xf32>
    %9 = vector.broadcast %7 : vector<1x32x2xf32> to vector<2x32x2xf32>
    %10 = arith.mulf %8, %9 : vector<2x32x2xf32>
    %cst_7 = arith.constant dense<0.000000e+00> : vector<2x2xf32>
    %11 = vector.multi_reduction <add>, %10, %cst_7 [1] : vector<2x32x2xf32> to vector<2x2xf32>
    %cst_8 = arith.constant 0.000000e+00 : f32
    %12 = vector.broadcast %cst_8 : f32 to vector<2x2xf32>
    %13 = arith.maximumf %11, %12 : vector<2x2xf32>
    %14 = vector.shape_cast %13 : vector<2x2xf32> to vector<2x2x1xf32>
    %15 = vector.shape_cast %6 : vector<2x32xf32> to vector<1x2x32xf32>
    %16 = vector.broadcast %14 : vector<2x2x1xf32> to vector<2x2x32xf32>
    %17 = vector.broadcast %15 : vector<1x2x32xf32> to vector<2x2x32xf32>
    %18 = arith.mulf %16, %17 : vector<2x2x32xf32>
    %cst_9 = arith.constant dense<0.000000e+00> : vector<2x32xf32>
    %19 = vector.multi_reduction <add>, %18, %cst_9 [1] : vector<2x2x32xf32> to vector<2x32xf32>
    %cst_10 = arith.constant 0.000000e+00 : f32
    %20 = vector.broadcast %cst_10 : f32 to vector<2x32xf32>
    %21 = arith.subf %20, %19 : vector<2x32xf32>
    %22 = math.exp %21 : vector<2x32xf32>
    %cst_11 = arith.constant 1.000000e+00 : f32
    %23 = vector.broadcast %cst_11 : f32 to vector<2x32xf32>
    %24 = arith.addf %23, %22 : vector<2x32xf32>
    %cst_12 = arith.constant 1.000000e+00 : f32
    %25 = vector.broadcast %cst_12 : f32 to vector<2x32xf32>
    %26 = arith.divf %25, %24 : vector<2x32xf32>
    %27 = vector.shape_cast %26 : vector<2x32xf32> to vector<2x32x1xf32>
    %28 = vector.broadcast %27 : vector<2x32x1xf32> to vector<2x32x256xf32>
    %29 = arith.mulf %0, %28 : vector<2x32x256xf32>
    %c0_13 = arith.constant 0 : index
    %c0_14 = arith.constant 0 : index
    %c0_15 = arith.constant 0 : index
    %30 = vector.load %arg4[%c0_13, %c0_14, %c0_15] : memref<2x32x256xf32, #tpu.memory_space<vmem>>, vector<2x32x256xf32>
    tpu.vector_store %arg4[%c0_13, %c0_14, %c0_15], %29 {strides = array<i32>} : memref<2x32x256xf32, #tpu.memory_space<vmem>>, vector<2x32x256xf32>,
    return
  }
  func.func @transform_0(%arg0: i32) -> (i32, i32, i32) {
    %c0_i32 = arith.constant 0 : i32
    %c0_i32_0 = arith.constant 0 : i32
    %c0_i32_1 = arith.constant 0 : i32
    return %arg0, %c0_i32, %c0_i32_0 : i32, i32, i32
  }
  func.func @transform_1(%arg0: i32) -> (i32, i32) {
    %c0_i32 = arith.constant 0 : i32
    %c0_i32_0 = arith.constant 0 : i32
    %c0_i32_1 = arith.constant 0 : i32
    return %c0_i32, %c0_i32_0 : i32, i32
  }
  func.func @transform_2(%arg0: i32) -> (i32, i32) {
    %c0_i32 = arith.constant 0 : i32
    %c0_i32_0 = arith.constant 0 : i32
    %c0_i32_1 = arith.constant 0 : i32
    return %c0_i32, %c0_i32_0 : i32, i32
  }
  func.func @transform_3(%arg0: i32) -> (i32, i32, i32) {
    %c0_i32 = arith.constant 0 : i32
    %c0_i32_0 = arith.constant 0 : i32
    %c0_i32_1 = arith.constant 0 : i32
    return %arg0, %c0_i32, %c0_i32_0 : i32, i32, i32
  }
}

</mosaic_0001>

<llo_original>
// kernel: tpu_custom_call.1
$region0: #{tpu_custom_call.1}
  #allocation0 [shape = 'u32[]', space=smem, size = 0x4, offset = 0x4, fixed_abs, tag = 'smem constant byte address 0x4 - core index']
  #allocation1 [shape = 'u32[144,128]{1,0:T(1,128)}', space=vmem, size = 0x12000, scoped, tag = 'internal scratch']
  %s0 = inlined_call_operand.hbm [shape: f32[2,32,256], index: 0, kind: input, shape index: {}]
  %s1 = inlined_call_operand.vmem [shape: f32[32,2], index: 1, kind: input, shape index: {}]
  %s2 = inlined_call_operand.vmem [shape: f32[2,32], index: 2, kind: input, shape index: {}]
  %s3 = inlined_call_operand.hbm [shape: f32[2,32,256], index: 3, kind: output, shape index: {}]
  %s4 = sld [smem:[#allocation0]]
  $region26: #{tpu_custom_call.1} parent=0
    _
  %s6 = ssub.s32 1, %s4
  %s7 = scalar_select 0, %s6, %s4
  $region1: #{tpu_custom_call.1} parent=0
    #allocation2 [shape = 'u8[65536]{0}', space=vmem, size = 0x10000, scoped, tag = 'input window, operand 0, single buffered']
    #allocation3 [shape = 's32[1]{0}', space=sflag, size = 0x4, scoped, tag = 'scoped memory for tpu_custom_call.1']
    #allocation4 [shape = 's32[1]{0}', space=sflag, size = 0x4, scoped, tag = 'scoped memory for tpu_custom_call.1']
    #allocation5 [shape = 'u8[65536]{0}', space=vmem, size = 0x10000, scoped, tag = 'output window, operand 0, single buffered']
    %8 = vsyncpa [#allocation3], 0
    %9 = vsyncpa [#allocation4], 0
    // Predicated region
    $region2: #{tpu_custom_call.1} parent=1 // pred_check
      _
    $region3: #{tpu_custom_call.1} parent=1 // pred_check_branch
      %11 = sbr.rel (0) target = $region5
    $region4: #{tpu_custom_call.1} parent=1 // pred_region
      %s13 = ssub.s32 2048, 2048
      %14 = vsyncadd [#allocation3], %s13
      %s15 = sshll.u32 [#allocation2], 4
      %s16 = int_to_ptr.vmem [resolvable:$true] %s15
      %21 = dma.hbm_to_vmem [thread:$0]  %s0, 2048, %s16, [#allocation3], 256, 256, 16
    $region5: #{tpu_custom_call.1} parent=1 // pred_fallthru
      _
    // Predicated region
    $region6: #{tpu_custom_call.1} parent=1 // pred_check
      _
    $region7: #{tpu_custom_call.1} parent=1 // pred_check_branch
      %23 = sbr.rel (0) target = $region9
    $region8: #{tpu_custom_call.1} parent=1 // pred_region
      _
    $region9: #{tpu_custom_call.1} parent=1 // pred_fallthru
      _
    // Predicated region
    $region10: #{tpu_custom_call.1} parent=1 // pred_check
      _
    $region11: #{tpu_custom_call.1} parent=1 // pred_check_branch
      %25 = sbr.rel (0) target = $region13
    $region12: #{tpu_custom_call.1} parent=1 // pred_region
      _
    $region13: #{tpu_custom_call.1} parent=1 // pred_fallthru
      _
    // Predicated region
    $region14: #{tpu_custom_call.1} parent=1 // pred_check
      _
    $region15: #{tpu_custom_call.1} parent=1 // pred_check_branch
      %27 = sbr.rel (0) target = $region17
    $region16: #{tpu_custom_call.1} parent=1 // pred_region
      %28 = dma.done [#allocation3], 2048
    $region17: #{tpu_custom_call.1} parent=1 // pred_fallthru
      _
    %v29 = vld [vmem:[#allocation2] sm:$0xff]
    %v30 = vld [vmem:[#allocation2 + $0x8] sm:$0xff]
    %v31 = vld [vmem:[#allocation2 + $0x10] sm:$0xff]
    %v32 = vld [vmem:[#allocation2 + $0x18] sm:$0xff]
    %v33 = vld [vmem:[#allocation2 + $0x20] sm:$0xff]
    %v34 = vld [vmem:[#allocation2 + $0x28] sm:$0xff]
    %v35 = vld [vmem:[#allocation2 + $0x30] sm:$0xff]
    %v36 = vld [vmem:[#allocation2 + $0x38] sm:$0xff]
    %v37 = vld [vmem:[#allocation2 + $0x40] sm:$0xff]
    %v38 = vld [vmem:[#allocation2 + $0x48] sm:$0xff]
    %v39 = vld [vmem:[#allocation2 + $0x50] sm:$0xff]
    %v40 = vld [vmem:[#allocation2 + $0x58] sm:$0xff]
    %v41 = vld [vmem:[#allocation2 + $0x60] sm:$0xff]
    %v42 = vld [vmem:[#allocation2 + $0x68] sm:$0xff]
    %v43 = vld [vmem:[#allocation2 + $0x70] sm:$0xff]
    %v44 = vld [vmem:[#allocation2 + $0x78] sm:$0xff]
    %v45 = vadd.f32 %v29, %v30
    %46 = vadd.xlane.f32.xlu0 %v45
    %v47 = vpop.xlane.xlu0 %46
    %v48 = vadd.f32 %v31, %v32
    %49 = vadd.xlane.f32.xlu0 %v48
    %v50 = vpop.xlane.xlu0 %49
    %v51 = vadd.f32 %v33, %v34
    %52 = vadd.xlane.f32.xlu0 %v51
    %v53 = vpop.xlane.xlu0 %52
    %v54 = vadd.f32 %v35, %v36
    %55 = vadd.xlane.f32.xlu0 %v54
    %v56 = vpop.xlane.xlu0 %55
    %v57 = vadd.f32 %v37, %v38
    %58 = vadd.xlane.f32.xlu0 %v57
    %v59 = vpop.xlane.xlu0 %58
    %v60 = vadd.f32 %v39, %v40
    %61 = vadd.xlane.f32.xlu0 %v60
    %v62 = vpop.xlane.xlu0 %61
    %v63 = vadd.f32 %v41, %v42
    %64 = vadd.xlane.f32.xlu0 %v63
    %v65 = vpop.xlane.xlu0 %64
    %v66 = vadd.f32 %v43, %v44
    %67 = vadd.xlane.f32.xlu0 %v66
    %v68 = vpop.xlane.xlu0 %67
    %v69 = vrcp.pop 256.0
    %v70 = vmul.f32 %v47, %v69
    %v71 = vmul.f32 %v50, %v69
    %v72 = vmul.f32 %v53, %v69
    %v73 = vmul.f32 %v56, %v69
    %v74 = vmul.f32 %v59, %v69
    %v75 = vmul.f32 %v62, %v69
    %v76 = vmul.f32 %v65, %v69
    %v77 = vmul.f32 %v68, %v69
    %v78 = vld [vmem:[%s1] sm:$0xff]
    %v79 = vld [vmem:[%s1 + $0x8] sm:$0xff]
    %v80 = vld [vmem:[%s1 + $0x10] sm:$0xff]
    %v81 = vld [vmem:[%s1 + $0x18] sm:$0xff]
    %v82 = vld [vmem:[%s2] sm:$0x3]
    %v83 = vmul.f32 %v70, %v78
    %v84 = vmul.f32 %v71, %v79
    %v85 = vmul.f32 %v72, %v80
    %v86 = vmul.f32 %v73, %v81
    %v87 = vmul.f32 %v74, %v78
    %v88 = vmul.f32 %v75, %v79
    %v89 = vmul.f32 %v76, %v80
    %v90 = vmul.f32 %v77, %v81
    %vm91 = vcmask 15360
    %v92 = vsel %vm91, %v83, 0.0
    %v93 = vsel %vm91, %v84, 0.0
    %v94 = vadd.f32 %v92, %v93
    %v95 = vsel %vm91, %v85, 0.0
    %v96 = vadd.f32 %v94, %v95
    %v97 = vsel %vm91, %v86, 0.0
    %v98 = vadd.f32 %v96, %v97
    %v99 = vrot.slane %v98, 4
    %v100 = vadd.f32 %v98, %v99
    %v101 = vrot.slane %v100, 2
    %v102 = vadd.f32 %v100, %v101
    %v103 = vrot.slane %v102, 1
    %v104 = vadd.f32 %v102, %v103
    %v105 = vsel %vm91, %v87, 0.0
    %v106 = vsel %vm91, %v88, 0.0
    %v107 = vadd.f32 %v105, %v106
    %v108 = vsel %vm91, %v89, 0.0
    %v109 = vadd.f32 %v107, %v108
    %v110 = vsel %vm91, %v90, 0.0
    %v111 = vadd.f32 %v109, %v110
    %v112 = vrot.slane %v111, 4
    %v113 = vadd.f32 %v111, %v112
    %v114 = vrot.slane %v113, 2
    %v115 = vadd.f32 %v113, %v114
    %v116 = vrot.slane %v115, 1
    %v117 = vadd.f32 %v115, %v116
    %v118 = vmax.f32 %v104, 0.0
    %v119 = vmax.f32 %v117, 0.0
    %121 = vbcast.lane.b32.xlu0 %v118, 256
    %v122 = vpop.permute.xlu0 %121
    %124 = vbcast.lane.b32.xlu0 %v119, 256
    %v125 = vpop.permute.xlu0 %124
    %v126 = vmul.f32 %v122, %v82
    %v127 = vmul.f32 %v125, %v82
    %vm128 = vcmask 254976
    %v129 = vsel %vm128, %v126, 0.0
    %v130 = vrot.slane %v129, 4
    %v131 = vadd.f32 %v129, %v130
    %v132 = vrot.slane %v131, 2
    %v133 = vadd.f32 %v131, %v132
    %v134 = vrot.slane %v133, 1
    %v135 = vadd.f32 %v133, %v134
    %v136 = vsel %vm128, %v127, 0.0
    %v137 = vrot.slane %v136, 4
    %v138 = vadd.f32 %v136, %v137
    %v139 = vrot.slane %v138, 2
    %v140 = vadd.f32 %v138, %v139
    %v141 = vrot.slane %v140, 1
    %v142 = vadd.f32 %v140, %v141
    %v143 = vsub.f32 0.0, %v135
    %v144 = vsub.f32 0.0, %v142
    %v145 = vmul.f32 %v143, 1.442695
    %v146 = vpow.pop %v145
    %v147 = vmul.f32 %v144, 1.442695
    %v148 = vpow.pop %v147
    %v149 = vadd.f32 %v146, 1.0
    %v150 = vadd.f32 %v148, 1.0
    %v151 = vrcp.pop %v149
    %v152 = vmul.f32 1.0, %v151
    %v153 = vrcp.pop %v150
    %v154 = vmul.f32 1.0, %v153
    %156 = vbcast.lane.b32.xlu0 %v152, 256
    %v157 = vpop.permute.xlu0 %156
    %s159 = sor.u32 256, 8
    %160 = vbcast.lane.b32.xlu0 %v152, %s159
    %v161 = vpop.permute.xlu0 %160
    %s163 = sor.u32 256, 16
    %164 = vbcast.lane.b32.xlu0 %v152, %s163
    %v165 = vpop.permute.xlu0 %164
    %s167 = sor.u32 256, 24
    %168 = vbcast.lane.b32.xlu0 %v152, %s167
    %v169 = vpop.permute.xlu0 %168
    %171 = vbcast.lane.b32.xlu0 %v154, 256
    %v172 = vpop.permute.xlu0 %171
    %s174 = sor.u32 256, 8
    %175 = vbcast.lane.b32.xlu0 %v154, %s174
    %v176 = vpop.permute.xlu0 %175
    %s178 = sor.u32 256, 16
    %179 = vbcast.lane.b32.xlu0 %v154, %s178
    %v180 = vpop.permute.xlu0 %179
    %s182 = sor.u32 256, 24
    %183 = vbcast.lane.b32.xlu0 %v154, %s182
    %v184 = vpop.permute.xlu0 %183
    %v185 = vmul.f32 %v29, %v157
    %v186 = vmul.f32 %v30, %v157
    %v187 = vmul.f32 %v31, %v161
    %v188 = vmul.f32 %v32, %v161
    %v189 = vmul.f32 %v33, %v165
    %v190 = vmul.f32 %v34, %v165
    %v191 = vmul.f32 %v35, %v169
    %v192 = vmul.f32 %v36, %v169
    %v193 = vmul.f32 %v37, %v172
    %v194 = vmul.f32 %v38, %v172
    %v195 = vmul.f32 %v39, %v176
    %v196 = vmul.f32 %v40, %v176
    %v197 = vmul.f32 %v41, %v180
    %v198 = vmul.f32 %v42, %v180
    %v199 = vmul.f32 %v43, %v184
    %v200 = vmul.f32 %v44, %v184
    %201 = vst [vmem:[#allocation5] sm:$0xff] %v185
    %202 = vst [vmem:[#allocation5 + $0x8] sm:$0xff] %v186
    %203 = vst [vmem:[#allocation5 + $0x10] sm:$0xff] %v187
    %204 = vst [vmem:[#allocation5 + $0x18] sm:$0xff] %v188
    %205 = vst [vmem:[#allocation5 + $0x20] sm:$0xff] %v189
    %206 = vst [vmem:[#allocation5 + $0x28] sm:$0xff] %v190
    %207 = vst [vmem:[#allocation5 + $0x30] sm:$0xff] %v191
    %208 = vst [vmem:[#allocation5 + $0x38] sm:$0xff] %v192
    %209 = vst [vmem:[#allocation5 + $0x40] sm:$0xff] %v193
    %210 = vst [vmem:[#allocation5 + $0x48] sm:$0xff] %v194
    %211 = vst [vmem:[#allocation5 + $0x50] sm:$0xff] %v195
    %212 = vst [vmem:[#allocation5 + $0x58] sm:$0xff] %v196
    %213 = vst [vmem:[#allocation5 + $0x60] sm:$0xff] %v197
    %214 = vst [vmem:[#allocation5 + $0x68] sm:$0xff] %v198
    %215 = vst [vmem:[#allocation5 + $0x70] sm:$0xff] %v199
    %216 = vst [vmem:[#allocation5 + $0x78] sm:$0xff] %v200
    // Predicated region
    $region18: #{tpu_custom_call.1} parent=1 // pred_check
      _
    $region19: #{tpu_custom_call.1} parent=1 // pred_check_branch
      %218 = sbr.rel (0) target = $region21
    $region20: #{tpu_custom_call.1} parent=1 // pred_region
      %s220 = ssub.s32 2048, 2048
      %221 = vsyncadd [#allocation4], %s220
      %s222 = sshll.u32 [#allocation5], 4
      %s223 = int_to_ptr.vmem [resolvable:$true] %s222
      %228 = dma.vmem_to_hbm [thread:$0]  %s223, 2048, %s3, [#allocation4], 256, 256, 16
    $region21: #{tpu_custom_call.1} parent=1 // pred_fallthru
      _
    // Predicated region
    $region22: #{tpu_custom_call.1} parent=1 // pred_check
      _
    $region23: #{tpu_custom_call.1} parent=1 // pred_check_branch
      %230 = sbr.rel (0) target = $region25
    $region24: #{tpu_custom_call.1} parent=1 // pred_region
      %231 = dma.done [#allocation4], 2048
    $region25: #{tpu_custom_call.1} parent=1 // pred_fallthru
      _
    %232 = vsyncpa [#allocation3], 1
    %233 = vsyncpa [#allocation4], 1

</llo_original>
